<compile_context>
chip_gen: v5e
topology: v5e:2x2
jax: 0.10.0
libtpu: 0.0.40
codegen_flags: <defaults>
</compile_context>

<pallas_src>
import jax
import jax.numpy as jnp
from jax import lax
from jax.experimental import pallas as pl
from jax.experimental.pallas import tpu as pltpu


def _round_up(x, m):
    return ((x + m - 1) // m) * m


def _cdiv(a, b):
    return (a + b - 1) // b


def _make_sxr_kernel(sub_rows, n_sub):
    """Kernel factory: fused Linear->Swish->Linear->Swish over one batch tile.

    The TB-row batch tile is processed in `n_sub` sub-tiles of `sub_rows` rows
    inside an unrolled fori_loop so the live intermediates stay bounded (the
    whole-tile h/y values would otherwise spill at large TB once the f32
    writeback stall no longer hides the spill traffic).
    """

    def kernel(beta1_ref, beta2_ref, x_ref, w1_ref, b1_ref, w2_ref, b2_ref, o_ref):
        beta1 = beta1_ref[0]
        beta2 = beta2_ref[0]
        w1 = w1_ref[...]            # (d_in, 128)   bf16, VMEM-resident
        b1 = b1_ref[...]            # (1, 128)      f32
        w2 = w2_ref[...]            # (128, d_out)  bf16, VMEM-resident
        b2 = b2_ref[...]            # (1, d_out)    f32

        def body(s, carry):
            r0 = pl.multiple_of(s * sub_rows, sub_rows)
            # ---- Linear 1: bf16 operands, f32 MXU accumulation (x cast in-kernel) ----
            xb = x_ref[pl.ds(r0, sub_rows), :].astype(jnp.bfloat16)
            h = jnp.dot(xb, w1, preferred_element_type=jnp.float32) + b1
            # ---- Swish 1: h * sigmoid(beta1*h); sigmoid via a single tanh (EUP) ----
            h = h * (0.5 + 0.5 * jnp.tanh(0.5 * beta1 * h))
            # ---- Linear 2 ----
            y = jnp.dot(h.astype(jnp.bfloat16), w2,
                        preferred_element_type=jnp.float32) + b2
            # ---- Swish 2 ----
            y = y * (0.5 + 0.5 * jnp.tanh(0.5 * beta2 * y))
            # lane-dense (multiple-of-128 wide) store, bf16 by default
            o_ref[pl.ds(r0, sub_rows), :] = y.astype(o_ref.dtype)
            return carry

        lax.fori_loop(0, n_sub, body, None, unroll=True)

    return kernel


def sxrnet_linear1_forward(x, params, output_size, *, block_b=1024,
                           out_dtype=jnp.bfloat16, flat_output=False):
    """x: (B, input_size) f32 -> (B, 1, output_size, output_size) `out_dtype`."""
    w1, b1, beta1 = params["w1"], params["b1"], params["beta1"]
    w2, b2, beta2 = params["w2"], params["b2"], params["beta2"]

    B, d_in = x.shape
    hidden = w1.shape[1]
    d_out = w2.shape[1]
    assert d_out == output_size * output_size
    # output_size**2 must be lane-dense (multiple of 128) for unmasked stores;
    # pad on the wrapper side if the module is ever built with a smaller size.
    assert d_out % 128 == 0, "pad output_size**2 to a multiple of 128"

    # MXU operands are bf16; init_params already stores the weights in bf16 so
    # these casts are no-ops (no per-call XLA cast pass). Biases stay f32 and
    # are added post-accumulation.
    w1 = w1.astype(jnp.bfloat16)
    w2 = w2.astype(jnp.bfloat16)
    b1 = b1.astype(jnp.float32).reshape(1, hidden)
    b2 = b2.astype(jnp.float32).reshape(1, d_out)
    beta1 = beta1.reshape(1).astype(jnp.float32)
    beta2 = beta2.reshape(1).astype(jnp.float32)

    # ---- batch tile selection ----
    Br = _round_up(B, 8)
    TB = min(block_b, Br)
    # v7x has 2 TensorCores: when the batch is big enough, make sure the
    # "parallel" batch axis has >= 2 grid steps (v5e/v6e are unaffected).
    if _cdiv(Br, TB) < 2 and Br >= 512:
        TB = _round_up(_cdiv(Br, 2), 16)
    Bp = _round_up(Br, TB)
    if Bp != B:
        x = jnp.pad(x, ((0, Bp - B), (0, 0)))
    grid = (Bp // TB,)

    # Inner sub-tile (bounds live ranges inside the kernel body).
    sub_rows = 256 if (TB % 256 == 0 and TB > 256) else TB
    n_sub = TB // sub_rows

    kernel = _make_sxr_kernel(sub_rows, n_sub)

    out_flat = pl.pallas_call(
        kernel,
        out_shape=jax.ShapeDtypeStruct((Bp, d_out), out_dtype),
        grid_spec=pltpu.PrefetchScalarGridSpec(
            num_scalar_prefetch=0,
            grid=grid,
            in_specs=[
                # scalar Swish betas -> SMEM, whole array (untiled)
                pl.BlockSpec(memory_space=pltpu.MemorySpace.SMEM),   # beta1
                pl.BlockSpec(memory_space=pltpu.MemorySpace.SMEM),   # beta2
                pl.BlockSpec((TB, d_in), lambda i: (i, 0)),          # x (batch tile)
                # weights/biases: constant index map -> DMA'd once, VMEM-resident.
                # TODO(synk): pipeline_mode=pl.Buffered(1) would drop their
                # redundant second buffer (~75 KB); left at default for safety.
                pl.BlockSpec((d_in, hidden), lambda i: (0, 0)),      # W1
                pl.BlockSpec((1, hidden), lambda i: (0, 0)),         # b1
                pl.BlockSpec((hidden, d_out), lambda i: (0, 0)),     # W2
                pl.BlockSpec((1, d_out), lambda i: (0, 0)),          # b2
            ],
            out_specs=pl.BlockSpec((TB, d_out), lambda i: (i, 0)),   # out (batch tile)
        ),
        compiler_params=pltpu.CompilerParams(
            dimension_semantics=("parallel",)),
    )(beta1, beta2, x, w1, b1, w2, b2)

    out_flat = out_flat[:B]
    if flat_output:
        # Lane-dense (B, out*out) slab -- prefer this if the consumer can take
        # the flat layout (the NCHW view has a 16-wide minor dim that the TPU
        # pads to 128 lanes and may relayout).
        return out_flat
    # Module semantics: Reshape(-1, 1, output_size, output_size).
    return out_flat.reshape(-1, 1, output_size, output_size)


def init_params(key, input_size, output_size, hidden=128):
    """Parameter init matching the PyTorch module's shapes.

    PyTorch Linear stores W as (out, in) and computes x @ W.T + b; we keep the
    transposed (in, out) layout so the kernel does x @ W directly.  Weights are
    stored pre-cast to bf16 (the MXU operand dtype) so there is no per-forward
    cast pass; biases and betas stay f32.
    """
    k1, k2, k3, k4 = jax.random.split(key, 4)
    d_out = output_size * output_size
    bound1 = input_size ** -0.5
    bound2 = hidden ** -0.5
    return {
        "w1": jax.random.uniform(k1, (input_size, hidden), jnp.float32,
                                 -bound1, bound1).astype(jnp.bfloat16),
        "b1": jax.random.uniform(k2, (1, hidden), jnp.float32, -bound1, bound1),
        "beta1": jnp.ones((1,), jnp.float32),      # Swish beta, init 1.0
        "w2": jax.random.uniform(k3, (hidden, d_out), jnp.float32,
                                 -bound2, bound2).astype(jnp.bfloat16),
        "b2": jax.random.uniform(k4, (1, d_out), jnp.float32, -bound2, bound2),
        "beta2": jnp.ones((1,), jnp.float32),      # second Swish beta, init 1.0
    }


def _reference_forward(x, params, output_size):
    """Pure-JAX f32 reference with the module's semantics (exact sigmoid)."""
    w1 = params["w1"].astype(jnp.float32)
    w2 = params["w2"].astype(jnp.float32)
    h = x @ w1 + params["b1"]
    h = h * jax.nn.sigmoid(params["beta1"][0] * h)
    y = h @ w2 + params["b2"]
    y = y * jax.nn.sigmoid(params["beta2"][0] * y)
    return y.reshape(-1, 1, output_size, output_size)


if __name__ == "__main__":
    INPUT_SIZE = 32      # input feature size
    OUTPUT_SIZE = 16     # spatial output: (B, 1, 16, 16); 16*16 = 256 lanes
    BATCH = 8

    key = jax.random.PRNGKey(0)
    kx, kp = jax.random.split(key)
    x = jax.random.normal(kx, (BATCH, INPUT_SIZE), jnp.float32)
    params = init_params(kp, INPUT_SIZE, OUTPUT_SIZE)

    out = sxrnet_linear1_forward(x, params, OUTPUT_SIZE)
    out = jax.block_until_ready(out)

    ref = _reference_forward(x, params, OUTPUT_SIZE)
    assert out.shape == (BATCH, 1, OUTPUT_SIZE, OUTPUT_SIZE), out.shape
    assert out.dtype == jnp.bfloat16, out.dtype
    # bf16 MXU operands + bf16 output rounding vs. the f32 reference
    # (the tanh-based sigmoid itself is exact -- no approx-reciprocal error).
    assert jnp.allclose(out.astype(jnp.float32), ref, atol=2e-2, rtol=2e-2), \
        "mismatch vs reference"

    print("KERNEL_OK")
</pallas_src>

<mosaic_0001>
module attributes {stable_mosaic.version = 11 : i64} {
  func.func @kernel(%arg0: i32, %arg1: memref<1xf32, #tpu.memory_space<smem>>, %arg2: memref<1xf32, #tpu.memory_space<smem>>, %arg3: memref<8x32xf32, #tpu.memory_space<vmem>>, %arg4: memref<32x128xbf16, #tpu.memory_space<vmem>>, %arg5: memref<1x128xf32, #tpu.memory_space<vmem>>, %arg6: memref<128x256xbf16, #tpu.memory_space<vmem>>, %arg7: memref<1x256xf32, #tpu.memory_space<vmem>>, %arg8: memref<8x256xbf16, #tpu.memory_space<vmem>>) attributes {dimension_semantics = [#tpu.dimension_semantics<parallel>], iteration_bounds = array<i64: 1>, scalar_prefetch = 0 : i64, scratch_operands = 0 : i64, tpu.core_type = #tpu.core_type<tc>, window_params = [{transform_indices = @transform_0, window_bounds = array<i64: 1>}, {transform_indices = @transform_1, window_bounds = array<i64: 1>}, {transform_indices = @transform_2, window_bounds = array<i64: 8, 32>}, {pipeline_mode = #tpu.pipeline_mode<synchronous>, transform_indices = @transform_3, window_bounds = array<i64: 32, 128>}, {pipeline_mode = #tpu.pipeline_mode<synchronous>, transform_indices = @transform_4, window_bounds = array<i64: 1, 128>}, {pipeline_mode = #tpu.pipeline_mode<synchronous>, transform_indices = @transform_5, window_bounds = array<i64: 128, 256>}, {pipeline_mode = #tpu.pipeline_mode<synchronous>, transform_indices = @transform_6, window_bounds = array<i64: 1, 256>}, {transform_indices = @transform_7, window_bounds = array<i64: 8, 256>}]} {
    %c0 = arith.constant 0 : index
    %0 = memref.load %arg1[%c0] : memref<1xf32, #tpu.memory_space<smem>>
    %c0_0 = arith.constant 0 : index
    %1 = memref.load %arg2[%c0_0] : memref<1xf32, #tpu.memory_space<smem>>
    %c0_1 = arith.constant 0 : index
    %c0_2 = arith.constant 0 : index
    %2 = vector.load %arg4[%c0_1, %c0_2] : memref<32x128xbf16, #tpu.memory_space<vmem>>, vector<32x128xbf16>
    %c0_3 = arith.constant 0 : index
    %c0_4 = arith.constant 0 : index
    %3 = vector.load %arg5[%c0_3, %c0_4] : memref<1x128xf32, #tpu.memory_space<vmem>>, vector<1x128xf32>
    %c0_5 = arith.constant 0 : index
    %c0_6 = arith.constant 0 : index
    %4 = vector.load %arg6[%c0_5, %c0_6] : memref<128x256xbf16, #tpu.memory_space<vmem>>, vector<128x256xbf16>
    %c0_7 = arith.constant 0 : index
    %c0_8 = arith.constant 0 : index
    %5 = vector.load %arg7[%c0_7, %c0_8] : memref<1x256xf32, #tpu.memory_space<vmem>>, vector<1x256xf32>
    %c0_i32 = arith.constant 0 : i32
    %c8_i32 = arith.constant 8 : i32
    %6 = arith.muli %c0_i32, %c8_i32 : i32
    %7 = tpu.assume_multiple %6, 8 : i32
    %8 = arith.index_cast %7 : i32 to index
    %c0_9 = arith.constant 0 : index
    %9 = vector.load %arg3[%8, %c0_9] : memref<8x32xf32, #tpu.memory_space<vmem>>, vector<8x32xf32>
    %10 = arith.truncf %9 : vector<8x32xf32> to vector<8x32xbf16>
    %cst = arith.constant dense<0.000000e+00> : vector<8x128xf32>
    %11 = tpu.matmul %10, %2, %cst {dimension_numbers = #tpu.dot_dimension_numbers<[1], [0], [0], [1], [0, 0, 1, 1], [], []>} : vector<8x32xbf16>, vector<32x128xbf16>, vector<8x128xf32> -> vector<8x128xf32>
    %12 = vector.broadcast %3 : vector<1x128xf32> to vector<8x128xf32>
    %13 = arith.addf %11, %12 : vector<8x128xf32>
    %cst_10 = arith.constant 5.000000e-01 : f32
    %14 = arith.mulf %cst_10, %0 : f32
    %15 = vector.broadcast %14 : f32 to vector<8x128xf32>
    %16 = arith.mulf %15, %13 : vector<8x128xf32>
    %17 = math.tanh %16 : vector<8x128xf32>
    %cst_11 = arith.constant 5.000000e-01 : f32
    %18 = vector.broadcast %cst_11 : f32 to vector<8x128xf32>
    %19 = arith.mulf %18, %17 : vector<8x128xf32>
    %cst_12 = arith.constant 5.000000e-01 : f32
    %20 = vector.broadcast %cst_12 : f32 to vector<8x128xf32>
    %21 = arith.addf %20, %19 : vector<8x128xf32>
    %22 = arith.mulf %13, %21 : vector<8x128xf32>
    %23 = arith.truncf %22 : vector<8x128xf32> to vector<8x128xbf16>
    %cst_13 = arith.constant dense<0.000000e+00> : vector<8x256xf32>
    %24 = tpu.matmul %23, %4, %cst_13 {dimension_numbers = #tpu.dot_dimension_numbers<[1], [0], [0], [1], [0, 0, 1, 1], [], []>} : vector<8x128xbf16>, vector<128x256xbf16>, vector<8x256xf32> -> vector<8x256xf32>
    %25 = vector.broadcast %5 : vector<1x256xf32> to vector<8x256xf32>
    %26 = arith.addf %24, %25 : vector<8x256xf32>
    %cst_14 = arith.constant 5.000000e-01 : f32
    %27 = arith.mulf %cst_14, %1 : f32
    %28 = vector.broadcast %27 : f32 to vector<8x256xf32>
    %29 = arith.mulf %28, %26 : vector<8x256xf32>
    %30 = math.tanh %29 : vector<8x256xf32>
    %cst_15 = arith.constant 5.000000e-01 : f32
    %31 = vector.broadcast %cst_15 : f32 to vector<8x256xf32>
    %32 = arith.mulf %31, %30 : vector<8x256xf32>
    %cst_16 = arith.constant 5.000000e-01 : f32
    %33 = vector.broadcast %cst_16 : f32 to vector<8x256xf32>
    %34 = arith.addf %33, %32 : vector<8x256xf32>
    %35 = arith.mulf %26, %34 : vector<8x256xf32>
    %36 = arith.truncf %35 : vector<8x256xf32> to vector<8x256xbf16>
    %37 = arith.index_cast %7 : i32 to index
    %c0_17 = arith.constant 0 : index
    %38 = vector.load %arg8[%37, %c0_17] : memref<8x256xbf16, #tpu.memory_space<vmem>>, vector<8x256xbf16>
    tpu.vector_store %arg8[%37, %c0_17], %36 {strides = array<i32>} : memref<8x256xbf16, #tpu.memory_space<vmem>>, vector<8x256xbf16>,
    %c1_i32 = arith.constant 1 : i32
    return
  }
  func.func @transform_0(%arg0: i32) -> i32 {
    %c0_i32 = arith.constant 0 : i32
    %c0_i32_0 = arith.constant 0 : i32
    return %c0_i32 : i32
  }
  func.func @transform_1(%arg0: i32) -> i32 {
    %c0_i32 = arith.constant 0 : i32
    %c0_i32_0 = arith.constant 0 : i32
    return %c0_i32 : i32
  }
  func.func @transform_2(%arg0: i32) -> (i32, i32) {
    %c0_i32 = arith.constant 0 : i32
    %c0_i32_0 = arith.constant 0 : i32
    return %arg0, %c0_i32 : i32, i32
  }
  func.func @transform_3(%arg0: i32) -> (i32, i32) {
    %c0_i32 = arith.constant 0 : i32
    %c0_i32_0 = arith.constant 0 : i32
    %c0_i32_1 = arith.constant 0 : i32
    return %c0_i32, %c0_i32_0 : i32, i32
  }
  func.func @transform_4(%arg0: i32) -> (i32, i32) {
    %c0_i32 = arith.constant 0 : i32
    %c0_i32_0 = arith.constant 0 : i32
    %c0_i32_1 = arith.constant 0 : i32
    return %c0_i32, %c0_i32_0 : i32, i32
  }
  func.func @transform_5(%arg0: i32) -> (i32, i32) {
    %c0_i32 = arith.constant 0 : i32
    %c0_i32_0 = arith.constant 0 : i32
    %c0_i32_1 = arith.constant 0 : i32
    return %c0_i32, %c0_i32_0 : i32, i32
  }
  func.func @transform_6(%arg0: i32) -> (i32, i32) {
    %c0_i32 = arith.constant 0 : i32
    %c0_i32_0 = arith.constant 0 : i32
    %c0_i32_1 = arith.constant 0 : i32
    return %c0_i32, %c0_i32_0 : i32, i32
  }
  func.func @transform_7(%arg0: i32) -> (i32, i32) {
    %c0_i32 = arith.constant 0 : i32
    %c0_i32_0 = arith.constant 0 : i32
    return %arg0, %c0_i32 : i32, i32
  }
}

</mosaic_0001>

<llo_original>
// kernel: tpu_custom_call.1
$region0: #{tpu_custom_call.1}
  #allocation0 [shape = 'u32[]', space=smem, size = 0x4, offset = 0x4, fixed_abs, tag = 'smem constant byte address 0x4 - core index']
  #allocation1 [shape = 'u32[72,128]{1,0:T(1,128)}', space=vmem, size = 0x9000, scoped, tag = 'internal scratch']
  #allocation2 [shape = 'f32[1]{0:T(128)S(6)}', space=smem, size = 0x200, scoped, tag = 'scoped memory for tpu_custom_call.1']
  #allocation3 [shape = 'f32[1]{0:T(128)S(6)}', space=smem, size = 0x200, scoped, tag = 'scoped memory for tpu_custom_call.1']
  %s0 = inlined_call_operand.<no memory space> [shape: f32[1], index: 0, kind: input, shape index: {}]
  %s1 = inlined_call_operand.<no memory space> [shape: f32[1], index: 1, kind: input, shape index: {}]
  %s2 = inlined_call_operand.hbm [shape: f32[8,32], index: 2, kind: input, shape index: {}]
  %s3 = inlined_call_operand.hbm [shape: bf16[32,128], index: 3, kind: input, shape index: {}]
  %s4 = inlined_call_operand.vmem [shape: f32[1,128], index: 4, kind: input, shape index: {}]
  %s5 = inlined_call_operand.hbm [shape: bf16[128,256], index: 5, kind: input, shape index: {}]
  %s6 = inlined_call_operand.vmem [shape: f32[1,256], index: 6, kind: input, shape index: {}]
  %s7 = inlined_call_operand.hbm [shape: bf16[8,256], index: 7, kind: output, shape index: {}]
  %s8 = sld [smem:[#allocation0]]
  $region50: #{tpu_custom_call.1} parent=0
    _
  %s10 = ssub.s32 1, %s8
  %s11 = scalar_select 0, %s10, %s8
  %12 = sst [smem:[#allocation2]] %s0
  %13 = sst [smem:[#allocation3]] %s1
  $region1: #{tpu_custom_call.1} parent=0
    #allocation4 [shape = 'u8[4096]{0}', space=vmem, size = 0x1000, scoped, tag = 'input window, operand 2, single buffered']
    #allocation5 [shape = 's32[1]{0}', space=sflag, size = 0x4, scoped, tag = 'scoped memory for tpu_custom_call.1']
    #allocation6 [shape = 's32[1]{0}', space=sflag, size = 0x4, scoped, tag = 'scoped memory for tpu_custom_call.1']
    #allocation7 [shape = 'u8[8192]{0}', space=vmem, size = 0x2000, scoped, tag = 'input window, operand 3, single buffered']
    #allocation8 [shape = 's32[1]{0}', space=sflag, size = 0x4, scoped, tag = 'scoped memory for tpu_custom_call.1']
    #allocation9 [shape = 'u8[65536]{0}', space=vmem, size = 0x10000, scoped, tag = 'input window, operand 5, single buffered']
    #allocation10 [shape = 'u8[4096]{0}', space=vmem, size = 0x1000, scoped, tag = 'output window, operand 0, single buffered']
    %14 = vsyncpa [#allocation5], 0
    %15 = vsyncpa [#allocation8], 0
    %16 = vsyncpa [#allocation6], 0
    // Predicated region
    $region2: #{tpu_custom_call.1} parent=1 // pred_check
      _
    $region3: #{tpu_custom_call.1} parent=1 // pred_check_branch
      %18 = sbr.rel (0) target = $region5
    $region4: #{tpu_custom_call.1} parent=1 // pred_region
      _
    $region5: #{tpu_custom_call.1} parent=1 // pred_fallthru
      _
    // Predicated region
    $region6: #{tpu_custom_call.1} parent=1 // pred_check
      _
    $region7: #{tpu_custom_call.1} parent=1 // pred_check_branch
      %20 = sbr.rel (0) target = $region9
    $region8: #{tpu_custom_call.1} parent=1 // pred_region
      _
    $region9: #{tpu_custom_call.1} parent=1 // pred_fallthru
      _
    // Predicated region
    $region10: #{tpu_custom_call.1} parent=1 // pred_check
      _
    $region11: #{tpu_custom_call.1} parent=1 // pred_check_branch
      %22 = sbr.rel (0) target = $region13
    $region12: #{tpu_custom_call.1} parent=1 // pred_region
      %24 = vsyncadd [#allocation5], 0
      %s26 = sshll.u32 %s2, 4
      %s27 = int_to_ptr.hbm [resolvable:$true] %s26
      %s28 = sshll.u32 [#allocation4], 4
      %s29 = int_to_ptr.vmem [resolvable:$true] %s28
      %31 = dma.hbm_to_vmem [thread:$0]  %s27, 128, %s29, [#allocation5]
    $region13: #{tpu_custom_call.1} parent=1 // pred_fallthru
      _
    // Predicated region
    $region14: #{tpu_custom_call.1} parent=1 // pred_check
      _
    $region15: #{tpu_custom_call.1} parent=1 // pred_check_branch
      %33 = sbr.rel (0) target = $region17
    $region16: #{tpu_custom_call.1} parent=1 // pred_region
      %35 = vsyncadd [#allocation8], 0
      %s36 = sshll.u32 %s3, 4
      %s37 = int_to_ptr.hbm [resolvable:$true] %s36
      %s38 = sshll.u32 [#allocation7], 4
      %s39 = int_to_ptr.vmem [resolvable:$true] %s38
      %44 = dma.hbm_to_vmem [thread:$0]  %s37, 256, %s39, [#allocation8], 64, 64, 4
    $region17: #{tpu_custom_call.1} parent=1 // pred_fallthru
      _
    // Predicated region
    $region18: #{tpu_custom_call.1} parent=1 // pred_check
      _
    $region19: #{tpu_custom_call.1} parent=1 // pred_check_branch
      %46 = sbr.rel (0) target = $region21
    $region20: #{tpu_custom_call.1} parent=1 // pred_region
      _
    $region21: #{tpu_custom_call.1} parent=1 // pred_fallthru
      _
    // Predicated region
    $region22: #{tpu_custom_call.1} parent=1 // pred_check
      _
    $region23: #{tpu_custom_call.1} parent=1 // pred_check_branch
      %48 = sbr.rel (0) target = $region25
    $region24: #{tpu_custom_call.1} parent=1 // pred_region
      %50 = vsyncadd [#allocation8], 0
      %s51 = sshll.u32 %s5, 4
      %s52 = int_to_ptr.hbm [resolvable:$true] %s51
      %s53 = sshll.u32 [#allocation9], 4
      %s54 = int_to_ptr.vmem [resolvable:$true] %s53
      %59 = dma.hbm_to_vmem [thread:$0]  %s52, 2048, %s54, [#allocation8], 128, 128, 8
    $region25: #{tpu_custom_call.1} parent=1 // pred_fallthru
      _
    // Predicated region
    $region26: #{tpu_custom_call.1} parent=1 // pred_check
      _
    $region27: #{tpu_custom_call.1} parent=1 // pred_check_branch
      %61 = sbr.rel (0) target = $region29
    $region28: #{tpu_custom_call.1} parent=1 // pred_region
      _
    $region29: #{tpu_custom_call.1} parent=1 // pred_fallthru
      _
    // Predicated region
    $region30: #{tpu_custom_call.1} parent=1 // pred_check
      _
    $region31: #{tpu_custom_call.1} parent=1 // pred_check_branch
      %63 = sbr.rel (0) target = $region33
    $region32: #{tpu_custom_call.1} parent=1 // pred_region
      %65 = dma.done [#allocation5], 128
    $region33: #{tpu_custom_call.1} parent=1 // pred_fallthru
      _
    // Predicated region
    $region34: #{tpu_custom_call.1} parent=1 // pred_check
      _
    $region35: #{tpu_custom_call.1} parent=1 // pred_check_branch
      %67 = sbr.rel (0) target = $region37
    $region36: #{tpu_custom_call.1} parent=1 // pred_region
      %69 = dma.done [#allocation8], 256
    $region37: #{tpu_custom_call.1} parent=1 // pred_fallthru
      _
    // Predicated region
    $region38: #{tpu_custom_call.1} parent=1 // pred_check
      _
    $region39: #{tpu_custom_call.1} parent=1 // pred_check_branch
      %71 = sbr.rel (0) target = $region41
    $region40: #{tpu_custom_call.1} parent=1 // pred_region
      %73 = dma.done [#allocation8], 2048
    $region41: #{tpu_custom_call.1} parent=1 // pred_fallthru
      _
    %s75 = sld [smem:[#allocation2]]
    %s76 = sld [smem:[#allocation3]]
    %v77 = vld [vmem:[#allocation7] sm:$0xf]
    %v78 = vld [vmem:[#allocation7 + $0x4] sm:$0xf]
    %v79 = vld [vmem:[#allocation7 + $0x8] sm:$0xf]
    %v80 = vld [vmem:[#allocation7 + $0xc] sm:$0xf]
    %v81 = vld [vmem:[%s4] sm:$0x1]
    %v82 = vld [vmem:[#allocation9] sm:$0xff]
    %v83 = vld [vmem:[#allocation9 + $0x8] sm:$0xff]
    %v84 = vld [vmem:[#allocation9 + $0x10] sm:$0xff]
    %v85 = vld [vmem:[#allocation9 + $0x18] sm:$0xff]
    %v86 = vld [vmem:[#allocation9 + $0x20] sm:$0xff]
    %v87 = vld [vmem:[#allocation9 + $0x28] sm:$0xff]
    %v88 = vld [vmem:[#allocation9 + $0x30] sm:$0xff]
    %v89 = vld [vmem:[#allocation9 + $0x38] sm:$0xff]
    %v90 = vld [vmem:[#allocation9 + $0x40] sm:$0xff]
    %v91 = vld [vmem:[#allocation9 + $0x48] sm:$0xff]
    %v92 = vld [vmem:[#allocation9 + $0x50] sm:$0xff]
    %v93 = vld [vmem:[#allocation9 + $0x58] sm:$0xff]
    %v94 = vld [vmem:[#allocation9 + $0x60] sm:$0xff]
    %v95 = vld [vmem:[#allocation9 + $0x68] sm:$0xff]
    %v96 = vld [vmem:[#allocation9 + $0x70] sm:$0xff]
    %v97 = vld [vmem:[#allocation9 + $0x78] sm:$0xff]
    %v98 = vld [vmem:[%s6] sm:$0x3]
    %v99 = vld [vmem:[#allocation4] sm:$0xff]
    %v100 = vpack.c.bf16 %v99, %v99
    %v102 = vperm.slane %v81, 0
    %v108 = vunpack.c.l.b16 %v77
    %v109 = vunpack.c.l.b16 %v78
    %v110 = vunpack.c.l.b16 %v79
    %v111 = vunpack.c.l.b16 %v80
    %v112 = vpack.c.b16 %v109, %v108
    %v113 = vpack.c.b16 %v111, %v110
    %vm116 = vcmask 261120
    %v118 = vsel %vm116, %v100, 0
    %120 = vmatpush.bf16.msra.mxu0 0
    %121 = vmatpush.bf16.msra.mxu0 0
    %122 = vmatpush.bf16.msra.mxu0 0
    %123 = vmatpush.bf16.msra.mxu0 0
    %124 = vmatpush.bf16.msra.mxu0 0
    %125 = vmatpush.bf16.msra.mxu0 0
    %126 = vmatpush.bf16.msra.mxu0 %v113
    %127 = vmatpush.bf16.msra.mxu0 %v112
    %128 = vmatmul.bf16.gmra.mxu0 %v118
    %v129 = vpop.f32.mrf.mxu0
    %v130 = vadd.f32 %v102, %v129
    %v131 = vpop.f32.mrf.mxu0
    %132 = vdwg.mxu0
    %s133 = smul.f32 %s75, 0.5
    %v134 = vstv %s133
    %v135 = vmul.f32 %v134, %v130
    %v136 = vtanh.pop %v135
    %v137 = vmul.f32 %v136, 0.5
    %v138 = vadd.f32 %v137, 0.5
    %v139 = vmul.f32 %v130, %v138
    %v140 = vpack.c.bf16 %v139, %v139
    %v142 = vperm.slane %v98, 0
    %v143 = vperm.slane %v98, 1
    %v162 = vunpack.c.l.b16 %v82
    %v163 = vunpack.c.h.b16 %v82
    %v164 = vunpack.c.l.b16 %v83
    %v165 = vunpack.c.h.b16 %v83
    %v166 = vunpack.c.l.b16 %v84
    %v167 = vunpack.c.h.b16 %v84
    %v168 = vunpack.c.l.b16 %v85
    %v169 = vunpack.c.h.b16 %v85
    %v170 = vunpack.c.l.b16 %v86
    %v171 = vunpack.c.h.b16 %v86
    %v172 = vunpack.c.l.b16 %v87
    %v173 = vunpack.c.h.b16 %v87
    %v174 = vunpack.c.l.b16 %v88
    %v175 = vunpack.c.h.b16 %v88
    %v176 = vunpack.c.l.b16 %v89
    %v177 = vunpack.c.h.b16 %v89
    %v178 = vunpack.c.l.b16 %v90
    %v179 = vunpack.c.h.b16 %v90
    %v180 = vunpack.c.l.b16 %v91
    %v181 = vunpack.c.h.b16 %v91
    %v182 = vunpack.c.l.b16 %v92
    %v183 = vunpack.c.h.b16 %v92
    %v184 = vunpack.c.l.b16 %v93
    %v185 = vunpack.c.h.b16 %v93
    %v186 = vunpack.c.l.b16 %v94
    %v187 = vunpack.c.h.b16 %v94
    %v188 = vunpack.c.l.b16 %v95
    %v189 = vunpack.c.h.b16 %v95
    %v190 = vunpack.c.l.b16 %v96
    %v191 = vunpack.c.h.b16 %v96
    %v192 = vunpack.c.l.b16 %v97
    %v193 = vunpack.c.h.b16 %v97
    %v194 = vpack.c.b16 %v164, %v162
    %v195 = vpack.c.b16 %v165, %v163
    %v196 = vpack.c.b16 %v168, %v166
    %v197 = vpack.c.b16 %v169, %v167
    %v198 = vpack.c.b16 %v172, %v170
    %v199 = vpack.c.b16 %v173, %v171
    %v200 = vpack.c.b16 %v176, %v174
    %v201 = vpack.c.b16 %v177, %v175
    %v202 = vpack.c.b16 %v180, %v178
    %v203 = vpack.c.b16 %v181, %v179
    %v204 = vpack.c.b16 %v184, %v182
    %v205 = vpack.c.b16 %v185, %v183
    %v206 = vpack.c.b16 %v188, %v186
    %v207 = vpack.c.b16 %v189, %v187
    %v208 = vpack.c.b16 %v192, %v190
    %v209 = vpack.c.b16 %v193, %v191
    %226 = vmatpush.bf16.msra.mxu0 %v208
    %227 = vmatpush.bf16.msra.mxu0 %v206
    %228 = vmatpush.bf16.msra.mxu0 %v204
    %229 = vmatpush.bf16.msra.mxu0 %v202
    %230 = vmatpush.bf16.msra.mxu0 %v200
    %231 = vmatpush.bf16.msra.mxu0 %v198
    %232 = vmatpush.bf16.msra.mxu0 %v196
    %233 = vmatpush.bf16.msra.mxu0 %v194
    %234 = vmatmul.bf16.gmra.mxu0 %v140
    %v235 = vpop.f32.mrf.mxu0
    %v236 = vadd.f32 %v142, %v235
    %v237 = vpop.f32.mrf.mxu0
    %238 = vdwg.mxu0
    %239 = vmatpush.bf16.msra.mxu0 %v209
    %240 = vmatpush.bf16.msra.mxu0 %v207
    %241 = vmatpush.bf16.msra.mxu0 %v205
    %242 = vmatpush.bf16.msra.mxu0 %v203
    %243 = vmatpush.bf16.msra.mxu0 %v201
    %244 = vmatpush.bf16.msra.mxu0 %v199
    %245 = vmatpush.bf16.msra.mxu0 %v197
    %246 = vmatpush.bf16.msra.mxu0 %v195
    %247 = vmatmul.bf16.gmra.mxu0 %v140
    %v248 = vpop.f32.mrf.mxu0
    %v249 = vadd.f32 %v143, %v248
    %v250 = vpop.f32.mrf.mxu0
    %251 = vdwg.mxu0
    %s252 = smul.f32 %s76, 0.5
    %v253 = vstv %s252
    %v254 = vmul.f32 %v253, %v236
    %v255 = vmul.f32 %v253, %v249
    %v256 = vtanh.pop %v254
    %v257 = vtanh.pop %v255
    %v258 = vmul.f32 %v256, 0.5
    %v259 = vmul.f32 %v257, 0.5
    %v260 = vadd.f32 %v258, 0.5
    %v261 = vadd.f32 %v259, 0.5
    %v262 = vmul.f32 %v236, %v260
    %v263 = vmul.f32 %v249, %v261
    %v264 = vpack.c.bf16 %v263, %v262
    %s265 = smul.u32 0, 2
    %s266 = smul.addr %s265, 4
    %s267 = scalar_lea.vmem [#allocation10], %s266
    %268 = vst [vmem:[%s267] sm:$0xff] %v264
    // Predicated region
    $region42: #{tpu_custom_call.1} parent=1 // pred_check
      _
    $region43: #{tpu_custom_call.1} parent=1 // pred_check_branch
      %270 = sbr.rel (0) target = $region45
    $region44: #{tpu_custom_call.1} parent=1 // pred_region
      %272 = vsyncadd [#allocation6], 0
      %s274 = sshll.u32 [#allocation10], 4
      %s275 = int_to_ptr.vmem [resolvable:$true] %s274
      %s276 = sshll.u32 %s7, 4
      %s277 = int_to_ptr.hbm [resolvable:$true] %s276
      %279 = dma.vmem_to_hbm [thread:$0]  %s275, 128, %s277, [#allocation6]
    $region45: #{tpu_custom_call.1} parent=1 // pred_fallthru
      _
    // Predicated region
    $region46: #{tpu_custom_call.1} parent=1 // pred_check
      _
    $region47: #{tpu_custom_call.1} parent=1 // pred_check_branch
      %281 = sbr.rel (0) target = $region49
    $region48: #{tpu_custom_call.1} parent=1 // pred_region
      %283 = dma.done [#allocation6], 128
    $region49: #{tpu_custom_call.1} parent=1 // pred_fallthru
      _
    %284 = vsyncpa [#allocation5], 1
    %285 = vsyncpa [#allocation8], 1
    %286 = vsyncpa [#allocation6], 1

</llo_original>
